<compile_context>
chip_gen: v7x
topology: tpu7x:2x2x1
jax: 0.10.0
libtpu: 0.0.40
codegen_flags: <defaults>
</compile_context>

<pallas_src>
import jax
import jax.numpy as jnp
from jax.experimental import pallas as pl
from jax.experimental.pallas import tpu as pltpu  # noqa: F401  (kept for TPU-specific tuning hooks)

# ----- "config" (small synthetic sizes, consistent with the module) -----
DIM_V   = 32      # visual feature dim
DIM_Q   = 32      # question feature dim
DIM_HV  = 32      # projected visual dim
DIM_HQ  = 32      # projected question dim
DIM_MM  = 64      # fused (Tucker) dim
R       = 3       # Tucker rank
NUM_ANS = 32      # number of answer classes
BATCH   = 16

# Packed-layout constants (lane-dense, multiples of 128).
IN_PAD = 128                    # padded [v | q | 0] input width
S1_PAD = 128                    # padded stage-1 output width ([x_v | x_q | 0])
S2_W   = 2 * R * DIM_MM         # 384 = [hv_0 hv_1 hv_2 | hq_0 hq_1 hq_2]
FC_PAD = 128                    # padded logits width
C1 = S1_PAD                     # 128: end of stage-1 weight block
C2 = C1 + S2_W                  # 512: end of stage-2 weight block
C3 = C2 + FC_PAD                # 640: end of fc weight block


def mutan_kernel(x_ref, w_ref, b_ref, out_ref):
    """Full MUTAN forward for the whole batch in one invocation."""
    x = x_ref[...]                                             # (B, 128) = [v | q | 0]

    # Stage-1 projections (both branches) fused via block-diagonal weight.
    h1 = jnp.tanh(
        jnp.dot(x, w_ref[:, 0:C1], preferred_element_type=jnp.float32)
        + b_ref[:, 0:C1])                                      # (B, 128) = [x_v | x_q | 0]

    # Rank-R bilinear projections for both branches in ONE matmul + ONE tanh.
    h2 = jnp.tanh(
        jnp.dot(h1, w_ref[:, C1:C2], preferred_element_type=jnp.float32)
        + b_ref[:, C1:C2])                                     # (B, 384)

    hv = h2[:, 0:R * DIM_MM]                                   # (B, 192)
    hq = h2[:, R * DIM_MM:2 * R * DIM_MM]                      # (B, 192)
    prod = hv * hq                                             # (B, 192)
    z = (prod[:, 0:DIM_MM]
         + prod[:, DIM_MM:2 * DIM_MM]
         + prod[:, 2 * DIM_MM:3 * DIM_MM])                     # sum over ranks, (B, 64)
    x_mm = jnp.tanh(z)                                         # (B, 64)

    # Final classifier (weights lane-padded to 128; padded lanes are zero).
    y = (jnp.dot(x_mm, w_ref[0:DIM_MM, C2:C3],
                 preferred_element_type=jnp.float32)
         + b_ref[:, C2:C3])                                    # (B, 128)
    out_ref[...] = y.astype(out_ref.dtype)


def pack_params(p):
    """Pack all 12 weight/bias arrays into one (128,640) weight and one (1,640) bias."""
    W = jnp.zeros((IN_PAD, C3), jnp.float32)
    b = jnp.zeros((1, C3), jnp.float32)

    # Stage 1: block-diagonal [W_v; W_q].
    W = W.at[0:DIM_V, 0:DIM_HV].set(p["wv"])
    W = W.at[DIM_V:DIM_V + DIM_Q, DIM_HV:DIM_HV + DIM_HQ].set(p["wq"])
    b = b.at[0, 0:DIM_HV].set(p["bv"][0])
    b = b.at[0, DIM_HV:DIM_HV + DIM_HQ].set(p["bq"][0])

    # Stage 2: block-diagonal of rank-concatenated projections.
    whv_cat = jnp.concatenate([p["whv"][r] for r in range(R)], axis=1)   # (32, 192)
    whq_cat = jnp.concatenate([p["whq"][r] for r in range(R)], axis=1)   # (32, 192)
    W = W.at[0:DIM_HV, C1:C1 + R * DIM_MM].set(whv_cat)
    W = W.at[DIM_HV:DIM_HV + DIM_HQ, C1 + R * DIM_MM:C2].set(whq_cat)
    b = b.at[0, C1:C1 + R * DIM_MM].set(p["bhv"].reshape(R * DIM_MM))
    b = b.at[0, C1 + R * DIM_MM:C2].set(p["bhq"].reshape(R * DIM_MM))

    # Classifier (lane-padded to FC_PAD).
    W = W.at[0:DIM_MM, C2:C2 + NUM_ANS].set(p["wfc"])
    b = b.at[0, C2:C2 + NUM_ANS].set(p["bfc"][0])
    return W, b


def mutan_forward(input_v, input_q, w_all, b_all):
    """Pallas-backed forward: single kernel invocation, whole batch, 3 packed inputs."""
    B = input_v.shape[0]
    pad = jnp.zeros((B, IN_PAD - DIM_V - DIM_Q), jnp.float32)
    x_in = jnp.concatenate([input_v, input_q, pad], axis=1)     # (B, 128), lane-dense

    out = pl.pallas_call(
        mutan_kernel,
        out_shape=jax.ShapeDtypeStruct((B, FC_PAD), jnp.float32),
    )(x_in, w_all, b_all)
    return out[:, :NUM_ANS]


def mutan_reference(input_v, input_q, p):
    """Pure-JAX reference mirroring the PyTorch forward (eval mode)."""
    x_v = jnp.tanh(input_v @ p["wv"] + p["bv"])
    x_q = jnp.tanh(input_q @ p["wq"] + p["bq"])
    acc = jnp.zeros((input_v.shape[0], DIM_MM), jnp.float32)
    for r in range(R):
        hv = jnp.tanh(x_v @ p["whv"][r] + p["bhv"][r])
        hq = jnp.tanh(x_q @ p["whq"][r] + p["bhq"][r])
        acc = acc + hv * hq
    x_mm = jnp.tanh(acc)
    return x_mm @ p["wfc"] + p["bfc"]


def init_params(key):
    """Deterministic synthetic weights (PyTorch-style uniform fan-in init)."""
    ks = jax.random.split(key, 12)

    def lin(k, fan_in, shape):
        bound = 1.0 / jnp.sqrt(jnp.float32(fan_in))
        return jax.random.uniform(k, shape, jnp.float32, -bound, bound)

    return {
        "wv":  lin(ks[0],  DIM_V,  (DIM_V, DIM_HV)),
        "bv":  lin(ks[1],  DIM_V,  (1, DIM_HV)),
        "wq":  lin(ks[2],  DIM_Q,  (DIM_Q, DIM_HQ)),
        "bq":  lin(ks[3],  DIM_Q,  (1, DIM_HQ)),
        "whv": lin(ks[4],  DIM_HV, (R, DIM_HV, DIM_MM)),
        "bhv": lin(ks[5],  DIM_HV, (R, DIM_MM)),
        "whq": lin(ks[6],  DIM_HQ, (R, DIM_HQ, DIM_MM)),
        "bhq": lin(ks[7],  DIM_HQ, (R, DIM_MM)),
        "wfc": lin(ks[8],  DIM_MM, (DIM_MM, NUM_ANS)),
        "bfc": lin(ks[9],  DIM_MM, (1, NUM_ANS)),
    }


if __name__ == "__main__":
    key = jax.random.PRNGKey(0)
    k_v, k_q, k_p = jax.random.split(key, 3)

    input_v = jax.random.normal(k_v, (BATCH, DIM_V), jnp.float32)   # visual features
    input_q = jax.random.normal(k_q, (BATCH, DIM_Q), jnp.float32)   # (pre-encoded) question features
    params = init_params(k_p)

    w_all, b_all = pack_params(params)

    logits = mutan_forward(input_v, input_q, w_all, b_all)
    logits = jax.block_until_ready(logits)

    ref = mutan_reference(input_v, input_q, params)
    assert logits.shape == (BATCH, NUM_ANS)
    assert jnp.allclose(logits, ref, atol=1e-4, rtol=1e-5), "Pallas output mismatch"

    print("KERNEL_OK")
</pallas_src>

<mosaic_0001>
module attributes {stable_mosaic.version = 11 : i64} {
  func.func @mutan_kernel(%arg0: memref<16x128xf32, #tpu.memory_space<vmem>>, %arg1: memref<128x640xf32, #tpu.memory_space<vmem>>, %arg2: memref<1x640xf32, #tpu.memory_space<vmem>>, %arg3: memref<16x128xf32, #tpu.memory_space<vmem>>) attributes {dimension_semantics = [], scalar_prefetch = 0 : i64, scratch_operands = 0 : i64, tpu.core_type = #tpu.core_type<tc>} {
    %c0 = arith.constant 0 : index
    %c0_0 = arith.constant 0 : index
    %0 = vector.load %arg0[%c0, %c0_0] : memref<16x128xf32, #tpu.memory_space<vmem>>, vector<16x128xf32>
    %c0_1 = arith.constant 0 : index
    %c0_2 = arith.constant 0 : index
    %1 = vector.load %arg1[%c0_1, %c0_2] : memref<128x640xf32, #tpu.memory_space<vmem>>, vector<128x128xf32>
    %cst = arith.constant dense<0.000000e+00> : vector<16x128xf32>
    %2 = tpu.matmul %0, %1, %cst {dimension_numbers = #tpu.dot_dimension_numbers<[1], [0], [0], [1], [0, 0, 1, 1], [], []>} : vector<16x128xf32>, vector<128x128xf32>, vector<16x128xf32> -> vector<16x128xf32>
    %c0_3 = arith.constant 0 : index
    %c0_4 = arith.constant 0 : index
    %3 = vector.load %arg2[%c0_3, %c0_4] : memref<1x640xf32, #tpu.memory_space<vmem>>, vector<1x128xf32>
    %4 = vector.broadcast %3 : vector<1x128xf32> to vector<16x128xf32>
    %5 = arith.addf %2, %4 : vector<16x128xf32>
    %6 = math.tanh %5 : vector<16x128xf32>
    %c0_5 = arith.constant 0 : index
    %c128 = arith.constant 128 : index
    %7 = vector.load %arg1[%c0_5, %c128] : memref<128x640xf32, #tpu.memory_space<vmem>>, vector<128x384xf32>
    %cst_6 = arith.constant dense<0.000000e+00> : vector<16x384xf32>
    %8 = tpu.matmul %6, %7, %cst_6 {dimension_numbers = #tpu.dot_dimension_numbers<[1], [0], [0], [1], [0, 0, 1, 1], [], []>} : vector<16x128xf32>, vector<128x384xf32>, vector<16x384xf32> -> vector<16x384xf32>
    %c0_7 = arith.constant 0 : index
    %c128_8 = arith.constant 128 : index
    %9 = vector.load %arg2[%c0_7, %c128_8] : memref<1x640xf32, #tpu.memory_space<vmem>>, vector<1x384xf32>
    %10 = vector.broadcast %9 : vector<1x384xf32> to vector<16x384xf32>
    %11 = arith.addf %8, %10 : vector<16x384xf32>
    %12 = math.tanh %11 : vector<16x384xf32>
    %13 = vector.extract_strided_slice %12 {offsets = [0, 0], sizes = [16, 192], strides = [1, 1]} : vector<16x384xf32> to vector<16x192xf32>
    %14 = vector.extract_strided_slice %12 {offsets = [0, 192], sizes = [16, 192], strides = [1, 1]} : vector<16x384xf32> to vector<16x192xf32>
    %15 = arith.mulf %13, %14 : vector<16x192xf32>
    %16 = vector.extract_strided_slice %15 {offsets = [0, 0], sizes = [16, 64], strides = [1, 1]} : vector<16x192xf32> to vector<16x64xf32>
    %17 = vector.extract_strided_slice %15 {offsets = [0, 64], sizes = [16, 64], strides = [1, 1]} : vector<16x192xf32> to vector<16x64xf32>
    %18 = arith.addf %16, %17 : vector<16x64xf32>
    %19 = vector.extract_strided_slice %15 {offsets = [0, 128], sizes = [16, 64], strides = [1, 1]} : vector<16x192xf32> to vector<16x64xf32>
    %20 = arith.addf %18, %19 : vector<16x64xf32>
    %21 = math.tanh %20 : vector<16x64xf32>
    %c0_9 = arith.constant 0 : index
    %c512 = arith.constant 512 : index
    %22 = vector.load %arg1[%c0_9, %c512] : memref<128x640xf32, #tpu.memory_space<vmem>>, vector<64x128xf32>
    %cst_10 = arith.constant dense<0.000000e+00> : vector<16x128xf32>
    %23 = tpu.matmul %21, %22, %cst_10 {dimension_numbers = #tpu.dot_dimension_numbers<[1], [0], [0], [1], [0, 0, 1, 1], [], []>} : vector<16x64xf32>, vector<64x128xf32>, vector<16x128xf32> -> vector<16x128xf32>
    %c0_11 = arith.constant 0 : index
    %c512_12 = arith.constant 512 : index
    %24 = vector.load %arg2[%c0_11, %c512_12] : memref<1x640xf32, #tpu.memory_space<vmem>>, vector<1x128xf32>
    %25 = vector.broadcast %24 : vector<1x128xf32> to vector<16x128xf32>
    %26 = arith.addf %23, %25 : vector<16x128xf32>
    %c0_13 = arith.constant 0 : index
    %c0_14 = arith.constant 0 : index
    %27 = vector.load %arg3[%c0_13, %c0_14] : memref<16x128xf32, #tpu.memory_space<vmem>>, vector<16x128xf32>
    tpu.vector_store %arg3[%c0_13, %c0_14], %26 {strides = array<i32>} : memref<16x128xf32, #tpu.memory_space<vmem>>, vector<16x128xf32>,
    return
  }
}

</mosaic_0001>

<llo_original>
// kernel: tpu_custom_call.1
$region0: #{tpu_custom_call.1}
  #allocation0 [shape = 'u32[]', space=smem, size = 0x4, offset = 0x4, fixed_abs, tag = 'smem constant byte address 0x4 - core index']
  #allocation1 [shape = 'u32[144,128]{1,0:T(1,128)}', space=vmem, size = 0x12000, scoped, tag = 'internal scratch']
  %s0 = inlined_call_operand.hbm [shape: f32[16,128], index: 0, kind: input, shape index: {}]
  %s1 = inlined_call_operand.hbm [shape: f32[128,640], index: 1, kind: input, shape index: {}]
  %s2 = inlined_call_operand.vmem [shape: f32[1,640], index: 2, kind: input, shape index: {}]
  %s3 = inlined_call_operand.hbm [shape: f32[16,128], index: 3, kind: output, shape index: {}]
  %s4 = sld [smem:[#allocation0]]
  $region30: #{tpu_custom_call.1} parent=0
    _
  %s6 = ssub.s32 1, %s4
  %s7 = scalar_select 0, %s6, %s4
  $region1: #{tpu_custom_call.1} parent=0
    #allocation2 [shape = 'u8[8192]{0}', space=vmem, size = 0x2000, scoped, tag = 'input window, operand 0, single buffered']
    #allocation3 [shape = 's32[1]{0}', space=sflag, size = 0x4, scoped, tag = 'scoped memory for tpu_custom_call.1']
    #allocation4 [shape = 's32[1]{0}', space=sflag, size = 0x4, scoped, tag = 'scoped memory for tpu_custom_call.1']
    #allocation5 [shape = 'u8[327680]{0}', space=vmem, size = 0x50000, scoped, tag = 'input window, operand 1, single buffered']
    #allocation6 [shape = 's32[1]{0}', space=sflag, size = 0x4, scoped, tag = 'scoped memory for tpu_custom_call.1']
    #allocation7 [shape = 'u8[8192]{0}', space=vmem, size = 0x2000, scoped, tag = 'output window, operand 0, single buffered']
    %8 = vsyncpa [#allocation3], 0
    %9 = vsyncpa [#allocation6], 0
    %10 = vsyncpa [#allocation4], 0
    // Predicated region
    $region2: #{tpu_custom_call.1} parent=1 // pred_check
      _
    $region3: #{tpu_custom_call.1} parent=1 // pred_check_branch
      %12 = sbr.rel (0) target = $region5
    $region4: #{tpu_custom_call.1} parent=1 // pred_region
      %s14 = ssub.s32 256, 256
      %15 = vsyncadd [#allocation3], %s14
      %s16 = sshll.u32 [#allocation2], 4
      %s17 = int_to_ptr.vmem [resolvable:$true] %s16
      %22 = dma.hbm_to_vmem [thread:$0]  %s0, 256, %s17, [#allocation3], 128, 128, 8
    $region5: #{tpu_custom_call.1} parent=1 // pred_fallthru
      _
    // Predicated region
    $region6: #{tpu_custom_call.1} parent=1 // pred_check
      _
    $region7: #{tpu_custom_call.1} parent=1 // pred_check_branch
      %24 = sbr.rel (0) target = $region9
    $region8: #{tpu_custom_call.1} parent=1 // pred_region
      %s26 = ssub.s32 10240, 10240
      %27 = vsyncadd [#allocation6], %s26
      %s28 = sshll.u32 [#allocation5], 4
      %s29 = int_to_ptr.vmem [resolvable:$true] %s28
      %34 = dma.hbm_to_vmem [thread:$0]  %s1, 10240, %s29, [#allocation6], 640, 640, 40
    $region9: #{tpu_custom_call.1} parent=1 // pred_fallthru
      _
    // Predicated region
    $region10: #{tpu_custom_call.1} parent=1 // pred_check
      _
    $region11: #{tpu_custom_call.1} parent=1 // pred_check_branch
      %36 = sbr.rel (0) target = $region13
    $region12: #{tpu_custom_call.1} parent=1 // pred_region
      _
    $region13: #{tpu_custom_call.1} parent=1 // pred_fallthru
      _
    // Predicated region
    $region14: #{tpu_custom_call.1} parent=1 // pred_check
      _
    $region15: #{tpu_custom_call.1} parent=1 // pred_check_branch
      %38 = sbr.rel (0) target = $region17
    $region16: #{tpu_custom_call.1} parent=1 // pred_region
      %39 = dma.done [#allocation3], 256
    $region17: #{tpu_custom_call.1} parent=1 // pred_fallthru
      _
    // Predicated region
    $region18: #{tpu_custom_call.1} parent=1 // pred_check
      _
    $region19: #{tpu_custom_call.1} parent=1 // pred_check_branch
      %41 = sbr.rel (0) target = $region21
    $region20: #{tpu_custom_call.1} parent=1 // pred_region
      %42 = dma.done [#allocation6], 10240
    $region21: #{tpu_custom_call.1} parent=1 // pred_fallthru
      _
    %v43 = vld [vmem:[#allocation2] sm:$0xff]
    %v44 = vld [vmem:[#allocation2 + $0x8] sm:$0xff]
    %v45 = vld [vmem:[#allocation5] sm:$0xff]
    %v46 = vld [vmem:[#allocation5 + $0x28] sm:$0xff]
    %v47 = vld [vmem:[#allocation5 + $0x50] sm:$0xff]
    %v48 = vld [vmem:[#allocation5 + $0x78] sm:$0xff]
    %v49 = vld [vmem:[#allocation5 + $0xa0] sm:$0xff]
    %v50 = vld [vmem:[#allocation5 + $0xc8] sm:$0xff]
    %v51 = vld [vmem:[#allocation5 + $0xf0] sm:$0xff]
    %v52 = vld [vmem:[#allocation5 + $0x118] sm:$0xff]
    %v53 = vld [vmem:[#allocation5 + $0x140] sm:$0xff]
    %v54 = vld [vmem:[#allocation5 + $0x168] sm:$0xff]
    %v55 = vld [vmem:[#allocation5 + $0x190] sm:$0xff]
    %v56 = vld [vmem:[#allocation5 + $0x1b8] sm:$0xff]
    %v57 = vld [vmem:[#allocation5 + $0x1e0] sm:$0xff]
    %v58 = vld [vmem:[#allocation5 + $0x208] sm:$0xff]
    %v59 = vld [vmem:[#allocation5 + $0x230] sm:$0xff]
    %v60 = vld [vmem:[#allocation5 + $0x258] sm:$0xff]
    %v61 = vld [vmem:[%s2] sm:$0x1]
    %v63 = vlaneseq
    %v64 = vshrl.u32 %v63, 7
    %v65 = vsub.s32 0, %v64
    %v66 = vrot.slane %v61, %v65
    %68 = vmatprep.subr.mxu0 0.0
    %69 = vmatpush1.msra.mxu0 %v45
    %70 = vmatprep.subr.mxu0 0.0
    %71 = vmatpush1.msra.mxu0 %v46
    %72 = vmatprep.subr.mxu0 0.0
    %73 = vmatpush1.msra.mxu0 %v47
    %74 = vmatprep.subr.mxu0 0.0
    %75 = vmatpush1.msra.mxu0 %v48
    %76 = vmatprep.subr.mxu0 0.0
    %77 = vmatpush1.msra.mxu0 %v49
    %78 = vmatprep.subr.mxu0 0.0
    %79 = vmatpush1.msra.mxu0 %v50
    %80 = vmatprep.subr.mxu0 0.0
    %81 = vmatpush1.msra.mxu0 %v51
    %82 = vmatprep.subr.mxu0 0.0
    %83 = vmatpush1.msra.mxu0 %v52
    %84 = vmatprep.subr.mxu0 0.0
    %85 = vmatpush1.msra.mxu0 %v53
    %86 = vmatprep.subr.mxu0 0.0
    %87 = vmatpush1.msra.mxu0 %v54
    %88 = vmatprep.subr.mxu0 0.0
    %89 = vmatpush1.msra.mxu0 %v55
    %90 = vmatprep.subr.mxu0 0.0
    %91 = vmatpush1.msra.mxu0 %v56
    %92 = vmatprep.subr.mxu0 0.0
    %93 = vmatpush1.msra.mxu0 %v57
    %94 = vmatprep.subr.mxu0 0.0
    %95 = vmatpush1.msra.mxu0 %v58
    %96 = vmatprep.subr.mxu0 0.0
    %97 = vmatpush1.msra.mxu0 %v59
    %98 = vmatprep.subr.mxu0 0.0
    %99 = vmatpush1.msra.mxu0 %v60
    %100 = vmatprep.subr.mxu0 0.0
    %101 = vmatpush1.msra.mxu0 0.0
    %102 = vmatprep.subr.mxu0 0.0
    %103 = vmatpush1.msra.mxu0 0.0
    %104 = vmatprep.subr.mxu0 0.0
    %105 = vmatpush1.msra.mxu0 0.0
    %106 = vmatprep.subr.mxu0 0.0
    %107 = vmatpush1.msra.mxu0 0.0
    %108 = vmatprep.subr.mxu0 0.0
    %109 = vmatpush1.msra.mxu0 0.0
    %110 = vmatprep.subr.mxu0 0.0
    %111 = vmatpush1.msra.mxu0 0.0
    %112 = vmatprep.subr.mxu0 0.0
    %113 = vmatpush1.msra.mxu0 0.0
    %114 = vmatprep.subr.mxu0 0.0
    %115 = vmatpush1.msra.mxu0 0.0
    %116 = vmatprep.subr.mxu0 0.0
    %117 = vmatpush1.msra.mxu0 0.0
    %118 = vmatprep.subr.mxu0 0.0
    %119 = vmatpush1.msra.mxu0 0.0
    %120 = vmatprep.subr.mxu0 0.0
    %121 = vmatpush1.msra.mxu0 0.0
    %122 = vmatprep.subr.mxu0 0.0
    %123 = vmatpush1.msra.mxu0 0.0
    %124 = vmatprep.subr.mxu0 0.0
    %125 = vmatpush1.msra.mxu0 0.0
    %126 = vmatprep.subr.mxu0 0.0
    %127 = vmatpush1.msra.mxu0 0.0
    %128 = vmatprep.subr.mxu0 0.0
    %129 = vmatpush1.msra.mxu0 0.0
    %130 = vmatprep.subr.mxu0 0.0
    %131 = vmatpush1.msra.mxu0 0.0
    %132 = vmatprep.mubr.f32.mxu0 0.0
    %133 = vmatmul.mubr.f32.gmra.mrb[0].mxu0 %v43
    %v134 = vpop.f32.mrb[0].mxu0
    %v135 = vadd.f32 %v66, %v134
    %v136 = vpop.f32.mrb[0].mxu0
    %137 = vmatprep.mubr.f32.mxu0 0.0
    %138 = vmatmul.mubr.f32.gmra.mrb[0].mxu0 %v44
    %v139 = vpop.f32.mrb[0].mxu0
    %v140 = vadd.f32 %v66, %v139
    %v141 = vpop.f32.mrb[0].mxu0
    %142 = vdwg.mxu0
    %v143 = vtanh.pop %v135
    %v144 = vtanh.pop %v140
    %v145 = vld [vmem:[#allocation5 + $0x8] sm:$0xff]
    %v146 = vld [vmem:[#allocation5 + $0x10] sm:$0xff]
    %v147 = vld [vmem:[#allocation5 + $0x18] sm:$0xff]
    %v148 = vld [vmem:[#allocation5 + $0x30] sm:$0xff]
    %v149 = vld [vmem:[#allocation5 + $0x38] sm:$0xff]
    %v150 = vld [vmem:[#allocation5 + $0x40] sm:$0xff]
    %v151 = vld [vmem:[#allocation5 + $0x58] sm:$0xff]
    %v152 = vld [vmem:[#allocation5 + $0x60] sm:$0xff]
    %v153 = vld [vmem:[#allocation5 + $0x68] sm:$0xff]
    %v154 = vld [vmem:[#allocation5 + $0x80] sm:$0xff]
    %v155 = vld [vmem:[#allocation5 + $0x88] sm:$0xff]
    %v156 = vld [vmem:[#allocation5 + $0x90] sm:$0xff]
    %v157 = vld [vmem:[#allocation5 + $0xa8] sm:$0xff]
    %v158 = vld [vmem:[#allocation5 + $0xb0] sm:$0xff]
    %v159 = vld [vmem:[#allocation5 + $0xb8] sm:$0xff]
    %v160 = vld [vmem:[#allocation5 + $0xd0] sm:$0xff]
    %v161 = vld [vmem:[#allocation5 + $0xd8] sm:$0xff]
    %v162 = vld [vmem:[#allocation5 + $0xe0] sm:$0xff]
    %v163 = vld [vmem:[#allocation5 + $0xf8] sm:$0xff]
    %v164 = vld [vmem:[#allocation5 + $0x100] sm:$0xff]
    %v165 = vld [vmem:[#allocation5 + $0x108] sm:$0xff]
    %v166 = vld [vmem:[#allocation5 + $0x120] sm:$0xff]
    %v167 = vld [vmem:[#allocation5 + $0x128] sm:$0xff]
    %v168 = vld [vmem:[#allocation5 + $0x130] sm:$0xff]
    %v169 = vld [vmem:[#allocation5 + $0x148] sm:$0xff]
    %v170 = vld [vmem:[#allocation5 + $0x150] sm:$0xff]
    %v171 = vld [vmem:[#allocation5 + $0x158] sm:$0xff]
    %v172 = vld [vmem:[#allocation5 + $0x170] sm:$0xff]
    %v173 = vld [vmem:[#allocation5 + $0x178] sm:$0xff]
    %v174 = vld [vmem:[#allocation5 + $0x180] sm:$0xff]
    %v175 = vld [vmem:[#allocation5 + $0x198] sm:$0xff]
    %v176 = vld [vmem:[#allocation5 + $0x1a0] sm:$0xff]
    %v177 = vld [vmem:[#allocation5 + $0x1a8] sm:$0xff]
    %v178 = vld [vmem:[#allocation5 + $0x1c0] sm:$0xff]
    %v179 = vld [vmem:[#allocation5 + $0x1c8] sm:$0xff]
    %v180 = vld [vmem:[#allocation5 + $0x1d0] sm:$0xff]
    %v181 = vld [vmem:[#allocation5 + $0x1e8] sm:$0xff]
    %v182 = vld [vmem:[#allocation5 + $0x1f0] sm:$0xff]
    %v183 = vld [vmem:[#allocation5 + $0x1f8] sm:$0xff]
    %v184 = vld [vmem:[#allocation5 + $0x210] sm:$0xff]
    %v185 = vld [vmem:[#allocation5 + $0x218] sm:$0xff]
    %v186 = vld [vmem:[#allocation5 + $0x220] sm:$0xff]
    %v187 = vld [vmem:[#allocation5 + $0x238] sm:$0xff]
    %v188 = vld [vmem:[#allocation5 + $0x240] sm:$0xff]
    %v189 = vld [vmem:[#allocation5 + $0x248] sm:$0xff]
    %v190 = vld [vmem:[#allocation5 + $0x260] sm:$0xff]
    %v191 = vld [vmem:[#allocation5 + $0x268] sm:$0xff]
    %v192 = vld [vmem:[#allocation5 + $0x270] sm:$0xff]
    %v193 = vld [vmem:[%s2 + $0x1] sm:$0x7]
    %v195 = vlaneseq
    %v196 = vshrl.u32 %v195, 7
    %v197 = vsub.s32 0, %v196
    %v198 = vrot.slane %v193, %v197
    %v199 = vlaneseq
    %v200 = vshrl.u32 %v199, 7
    %v201 = vsub.s32 1, %v200
    %v202 = vrot.slane %v193, %v201
    %v203 = vlaneseq
    %v204 = vshrl.u32 %v203, 7
    %v205 = vsub.s32 2, %v204
    %v206 = vrot.slane %v193, %v205
    %210 = vmatprep.subr.mxu0 %v146
    %211 = vmatpush1.msra.mxu0 %v145
    %212 = vmatprep.subr.mxu0 %v149
    %213 = vmatpush1.msra.mxu0 %v148
    %214 = vmatprep.subr.mxu0 %v152
    %215 = vmatpush1.msra.mxu0 %v151
    %216 = vmatprep.subr.mxu0 %v155
    %217 = vmatpush1.msra.mxu0 %v154
    %218 = vmatprep.subr.mxu0 %v158
    %219 = vmatpush1.msra.mxu0 %v157
    %220 = vmatprep.subr.mxu0 %v161
    %221 = vmatpush1.msra.mxu0 %v160
    %222 = vmatprep.subr.mxu0 %v164
    %223 = vmatpush1.msra.mxu0 %v163
    %224 = vmatprep.subr.mxu0 %v167
    %225 = vmatpush1.msra.mxu0 %v166
    %226 = vmatprep.subr.mxu0 %v170
    %227 = vmatpush1.msra.mxu0 %v169
    %228 = vmatprep.subr.mxu0 %v173
    %229 = vmatpush1.msra.mxu0 %v172
    %230 = vmatprep.subr.mxu0 %v176
    %231 = vmatpush1.msra.mxu0 %v175
    %232 = vmatprep.subr.mxu0 %v179
    %233 = vmatpush1.msra.mxu0 %v178
    %234 = vmatprep.subr.mxu0 %v182
    %235 = vmatpush1.msra.mxu0 %v181
    %236 = vmatprep.subr.mxu0 %v185
    %237 = vmatpush1.msra.mxu0 %v184
    %238 = vmatprep.subr.mxu0 %v188
    %239 = vmatpush1.msra.mxu0 %v187
    %240 = vmatprep.subr.mxu0 %v191
    %241 = vmatpush1.msra.mxu0 %v190
    %242 = vmatprep.subr.mxu0 0.0
    %243 = vmatpush1.msra.mxu0 0.0
    %244 = vmatprep.subr.mxu0 0.0
    %245 = vmatpush1.msra.mxu0 0.0
    %246 = vmatprep.subr.mxu0 0.0
    %247 = vmatpush1.msra.mxu0 0.0
    %248 = vmatprep.subr.mxu0 0.0
    %249 = vmatpush1.msra.mxu0 0.0
    %250 = vmatprep.subr.mxu0 0.0
    %251 = vmatpush1.msra.mxu0 0.0
    %252 = vmatprep.subr.mxu0 0.0
    %253 = vmatpush1.msra.mxu0 0.0
    %254 = vmatprep.subr.mxu0 0.0
    %255 = vmatpush1.msra.mxu0 0.0
    %256 = vmatprep.subr.mxu0 0.0
    %257 = vmatpush1.msra.mxu0 0.0
    %258 = vmatprep.subr.mxu0 0.0
    %259 = vmatpush1.msra.mxu0 0.0
    %260 = vmatprep.subr.mxu0 0.0
    %261 = vmatpush1.msra.mxu0 0.0
    %262 = vmatprep.subr.mxu0 0.0
    %263 = vmatpush1.msra.mxu0 0.0
    %264 = vmatprep.subr.mxu0 0.0
    %265 = vmatpush1.msra.mxu0 0.0
    %266 = vmatprep.subr.mxu0 0.0
    %267 = vmatpush1.msra.mxu0 0.0
    %268 = vmatprep.subr.mxu0 0.0
    %269 = vmatpush1.msra.mxu0 0.0
    %270 = vmatprep.subr.mxu0 0.0
    %271 = vmatpush1.msra.mxu0 0.0
    %272 = vmatprep.subr.mxu0 0.0
    %273 = vmatpush1.msra.mxu0 0.0
    %274 = vmatprep.mubr.f32.mxu0 0.0
    %275 = vmatmul.mubr.f32.gmra.mrb[0].mxu0 %v143
    %v276 = vpop.f32.mrb[0].mxu0
    %v277 = vadd.f32 %v198, %v276
    %v278 = vpop.f32.mrb[0].mxu0
    %v279 = vadd.f32 %v202, %v278
    %280 = vmatprep.mubr.f32.mxu0 0.0
    %281 = vmatmul.mubr.f32.gmra.mrb[0].mxu0 %v144
    %v282 = vpop.f32.mrb[0].mxu0
    %v283 = vadd.f32 %v198, %v282
    %v284 = vpop.f32.mrb[0].mxu0
    %v285 = vadd.f32 %v202, %v284
    %286 = vdwg.mxu0
    %287 = vmatprep.subr.mxu0 0.0
    %288 = vmatpush1.msra.mxu0 %v147
    %289 = vmatprep.subr.mxu0 0.0
    %290 = vmatpush1.msra.mxu0 %v150
    %291 = vmatprep.subr.mxu0 0.0
    %292 = vmatpush1.msra.mxu0 %v153
    %293 = vmatprep.subr.mxu0 0.0
    %294 = vmatpush1.msra.mxu0 %v156
    %295 = vmatprep.subr.mxu0 0.0
    %296 = vmatpush1.msra.mxu0 %v159
    %297 = vmatprep.subr.mxu0 0.0
    %298 = vmatpush1.msra.mxu0 %v162
    %299 = vmatprep.subr.mxu0 0.0
    %300 = vmatpush1.msra.mxu0 %v165
    %301 = vmatprep.subr.mxu0 0.0
    %302 = vmatpush1.msra.mxu0 %v168
    %303 = vmatprep.subr.mxu0 0.0
    %304 = vmatpush1.msra.mxu0 %v171
    %305 = vmatprep.subr.mxu0 0.0
    %306 = vmatpush1.msra.mxu0 %v174
    %307 = vmatprep.subr.mxu0 0.0
    %308 = vmatpush1.msra.mxu0 %v177
    %309 = vmatprep.subr.mxu0 0.0
    %310 = vmatpush1.msra.mxu0 %v180
    %311 = vmatprep.subr.mxu0 0.0
    %312 = vmatpush1.msra.mxu0 %v183
    %313 = vmatprep.subr.mxu0 0.0
    %314 = vmatpush1.msra.mxu0 %v186
    %315 = vmatprep.subr.mxu0 0.0
    %316 = vmatpush1.msra.mxu0 %v189
    %317 = vmatprep.subr.mxu0 0.0
    %318 = vmatpush1.msra.mxu0 %v192
    %319 = vmatprep.subr.mxu0 0.0
    %320 = vmatpush1.msra.mxu0 0.0
    %321 = vmatprep.subr.mxu0 0.0
    %322 = vmatpush1.msra.mxu0 0.0
    %323 = vmatprep.subr.mxu0 0.0
    %324 = vmatpush1.msra.mxu0 0.0
    %325 = vmatprep.subr.mxu0 0.0
    %326 = vmatpush1.msra.mxu0 0.0
    %327 = vmatprep.subr.mxu0 0.0
    %328 = vmatpush1.msra.mxu0 0.0
    %329 = vmatprep.subr.mxu0 0.0
    %330 = vmatpush1.msra.mxu0 0.0
    %331 = vmatprep.subr.mxu0 0.0
    %332 = vmatpush1.msra.mxu0 0.0
    %333 = vmatprep.subr.mxu0 0.0
    %334 = vmatpush1.msra.mxu0 0.0
    %335 = vmatprep.subr.mxu0 0.0
    %336 = vmatpush1.msra.mxu0 0.0
    %337 = vmatprep.subr.mxu0 0.0
    %338 = vmatpush1.msra.mxu0 0.0
    %339 = vmatprep.subr.mxu0 0.0
    %340 = vmatpush1.msra.mxu0 0.0
    %341 = vmatprep.subr.mxu0 0.0
    %342 = vmatpush1.msra.mxu0 0.0
    %343 = vmatprep.subr.mxu0 0.0
    %344 = vmatpush1.msra.mxu0 0.0
    %345 = vmatprep.subr.mxu0 0.0
    %346 = vmatpush1.msra.mxu0 0.0
    %347 = vmatprep.subr.mxu0 0.0
    %348 = vmatpush1.msra.mxu0 0.0
    %349 = vmatprep.subr.mxu0 0.0
    %350 = vmatpush1.msra.mxu0 0.0
    %351 = vmatprep.mubr.f32.mxu0 0.0
    %352 = vmatmul.mubr.f32.gmra.mrb[0].mxu0 %v143
    %v353 = vpop.f32.mrb[0].mxu0
    %v354 = vadd.f32 %v206, %v353
    %v355 = vpop.f32.mrb[0].mxu0
    %356 = vmatprep.mubr.f32.mxu0 0.0
    %357 = vmatmul.mubr.f32.gmra.mrb[0].mxu0 %v144
    %v358 = vpop.f32.mrb[0].mxu0
    %v359 = vadd.f32 %v206, %v358
    %v360 = vpop.f32.mrb[0].mxu0
    %361 = vdwg.mxu0
    %v362 = vtanh.pop %v277
    %v363 = vtanh.pop %v279
    %v364 = vtanh.pop %v354
    %v365 = vtanh.pop %v283
    %v366 = vtanh.pop %v285
    %v367 = vtanh.pop %v359
    %372 = vrot.lane.b32.xlu0 %v363, 64
    %v373 = vpop.permute.xlu0 %372
    %374 = vrot.lane.b32.xlu0 %v364, 64
    %v375 = vpop.permute.xlu0 %374
    %376 = vrot.lane.b32.xlu0 %v366, 64
    %v377 = vpop.permute.xlu0 %376
    %378 = vrot.lane.b32.xlu0 %v367, 64
    %v379 = vpop.permute.xlu0 %378
    %vm380 = vcmask 523264
    %v381 = vsel %vm380, %v373, %v375
    %v382 = vsel %vm380, %v377, %v379
    %v387 = vmul.f32 %v362, %v381
    %v388 = vmul.f32 %v363, %v375
    %v389 = vmul.f32 %v365, %v382
    %v390 = vmul.f32 %v366, %v379
    %393 = vrot.lane.b32.xlu0 %v387, 64
    %v394 = vpop.permute.xlu0 %393
    %395 = vrot.lane.b32.xlu0 %v389, 64
    %v396 = vpop.permute.xlu0 %395
    %v399 = vadd.f32 %v387, %v394
    %v400 = vadd.f32 %v389, %v396
    %v401 = vadd.f32 %v399, %v388
    %v402 = vadd.f32 %v400, %v390
    %v403 = vtanh.pop %v401
    %v404 = vtanh.pop %v402
    %v405 = vld [vmem:[#allocation5 + $0x20] sm:$0xff]
    %v406 = vld [vmem:[#allocation5 + $0x48] sm:$0xff]
    %v407 = vld [vmem:[#allocation5 + $0x70] sm:$0xff]
    %v408 = vld [vmem:[#allocation5 + $0x98] sm:$0xff]
    %v409 = vld [vmem:[#allocation5 + $0xc0] sm:$0xff]
    %v410 = vld [vmem:[#allocation5 + $0xe8] sm:$0xff]
    %v411 = vld [vmem:[#allocation5 + $0x110] sm:$0xff]
    %v412 = vld [vmem:[#allocation5 + $0x138] sm:$0xff]
    %v413 = vld [vmem:[%s2 + $0x4] sm:$0x1]
    %v415 = vlaneseq
    %v416 = vshrl.u32 %v415, 7
    %v417 = vsub.s32 0, %v416
    %v418 = vrot.slane %v413, %v417
    %v421 = vsel %vm380, %v403, 0
    %v424 = vsel %vm380, %v404, 0
    %426 = vmatprep.subr.mxu0 0.0
    %427 = vmatpush1.msra.mxu0 %v405
    %428 = vmatprep.subr.mxu0 0.0
    %429 = vmatpush1.msra.mxu0 %v406
    %430 = vmatprep.subr.mxu0 0.0
    %431 = vmatpush1.msra.mxu0 %v407
    %432 = vmatprep.subr.mxu0 0.0
    %433 = vmatpush1.msra.mxu0 %v408
    %434 = vmatprep.subr.mxu0 0.0
    %435 = vmatpush1.msra.mxu0 %v409
    %436 = vmatprep.subr.mxu0 0.0
    %437 = vmatpush1.msra.mxu0 %v410
    %438 = vmatprep.subr.mxu0 0.0
    %439 = vmatpush1.msra.mxu0 %v411
    %440 = vmatprep.subr.mxu0 0.0
    %441 = vmatpush1.msra.mxu0 %v412
    %442 = vmatprep.subr.mxu0 0.0
    %443 = vmatpush1.msra.mxu0 0.0
    %444 = vmatprep.subr.mxu0 0.0
    %445 = vmatpush1.msra.mxu0 0.0
    %446 = vmatprep.subr.mxu0 0.0
    %447 = vmatpush1.msra.mxu0 0.0
    %448 = vmatprep.subr.mxu0 0.0
    %449 = vmatpush1.msra.mxu0 0.0
    %450 = vmatprep.subr.mxu0 0.0
    %451 = vmatpush1.msra.mxu0 0.0
    %452 = vmatprep.subr.mxu0 0.0
    %453 = vmatpush1.msra.mxu0 0.0
    %454 = vmatprep.subr.mxu0 0.0
    %455 = vmatpush1.msra.mxu0 0.0
    %456 = vmatprep.subr.mxu0 0.0
    %457 = vmatpush1.msra.mxu0 0.0
    %458 = vmatprep.subr.mxu0 0.0
    %459 = vmatpush1.msra.mxu0 0.0
    %460 = vmatprep.subr.mxu0 0.0
    %461 = vmatpush1.msra.mxu0 0.0
    %462 = vmatprep.subr.mxu0 0.0
    %463 = vmatpush1.msra.mxu0 0.0
    %464 = vmatprep.subr.mxu0 0.0
    %465 = vmatpush1.msra.mxu0 0.0
    %466 = vmatprep.subr.mxu0 0.0
    %467 = vmatpush1.msra.mxu0 0.0
    %468 = vmatprep.subr.mxu0 0.0
    %469 = vmatpush1.msra.mxu0 0.0
    %470 = vmatprep.subr.mxu0 0.0
    %471 = vmatpush1.msra.mxu0 0.0
    %472 = vmatprep.subr.mxu0 0.0
    %473 = vmatpush1.msra.mxu0 0.0
    %474 = vmatprep.subr.mxu0 0.0
    %475 = vmatpush1.msra.mxu0 0.0
    %476 = vmatprep.subr.mxu0 0.0
    %477 = vmatpush1.msra.mxu0 0.0
    %478 = vmatprep.subr.mxu0 0.0
    %479 = vmatpush1.msra.mxu0 0.0
    %480 = vmatprep.subr.mxu0 0.0
    %481 = vmatpush1.msra.mxu0 0.0
    %482 = vmatprep.subr.mxu0 0.0
    %483 = vmatpush1.msra.mxu0 0.0
    %484 = vmatprep.subr.mxu0 0.0
    %485 = vmatpush1.msra.mxu0 0.0
    %486 = vmatprep.subr.mxu0 0.0
    %487 = vmatpush1.msra.mxu0 0.0
    %488 = vmatprep.subr.mxu0 0.0
    %489 = vmatpush1.msra.mxu0 0.0
    %490 = vmatprep.mubr.f32.mxu0 0.0
    %491 = vmatmul.mubr.f32.gmra.mrb[0].mxu0 %v421
    %v492 = vpop.f32.mrb[0].mxu0
    %v493 = vadd.f32 %v418, %v492
    %v494 = vpop.f32.mrb[0].mxu0
    %495 = vmatprep.mubr.f32.mxu0 0.0
    %496 = vmatmul.mubr.f32.gmra.mrb[0].mxu0 %v424
    %v497 = vpop.f32.mrb[0].mxu0
    %v498 = vadd.f32 %v418, %v497
    %v499 = vpop.f32.mrb[0].mxu0
    %500 = vdwg.mxu0
    %501 = vst [vmem:[#allocation7] sm:$0xff] %v493
    %502 = vst [vmem:[#allocation7 + $0x8] sm:$0xff] %v498
    // Predicated region
    $region22: #{tpu_custom_call.1} parent=1 // pred_check
      _
    $region23: #{tpu_custom_call.1} parent=1 // pred_check_branch
      %504 = sbr.rel (0) target = $region25
    $region24: #{tpu_custom_call.1} parent=1 // pred_region
      %s506 = ssub.s32 256, 256
      %507 = vsyncadd [#allocation4], %s506
      %s508 = sshll.u32 [#allocation7], 4
      %s509 = int_to_ptr.vmem [resolvable:$true] %s508
      %514 = dma.vmem_to_hbm [thread:$0]  %s509, 256, %s3, [#allocation4], 128, 128, 8
    $region25: #{tpu_custom_call.1} parent=1 // pred_fallthru
      _
    // Predicated region
    $region26: #{tpu_custom_call.1} parent=1 // pred_check
      _
    $region27: #{tpu_custom_call.1} parent=1 // pred_check_branch
      %516 = sbr.rel (0) target = $region29
    $region28: #{tpu_custom_call.1} parent=1 // pred_region
      %517 = dma.done [#allocation4], 256
    $region29: #{tpu_custom_call.1} parent=1 // pred_fallthru
      _
    %518 = vsyncpa [#allocation3], 1
    %519 = vsyncpa [#allocation6], 1
    %520 = vsyncpa [#allocation4], 1

</llo_original>
